<compile_context>
chip_gen: v7x
topology: tpu7x:2x2x1
jax: 0.10.0
libtpu: 0.0.40
codegen_flags: <defaults>
</compile_context>

<pallas_src>
import functools

import jax
import jax.numpy as jnp
from jax.experimental import pallas as pl
from jax.experimental.pallas import tpu as pltpu


def _round_up(x: int, m: int) -> int:
    return ((x + m - 1) // m) * m


def _largest_divisor_tile(padded_dim: int, unit: int, max_tile: int) -> int:
    """Largest multiple of `unit` that divides `padded_dim` and is <= max_tile."""
    m = padded_dim // unit
    best = 1
    for d in range(min(m, max(max_tile // unit, 1)), 0, -1):
        if m % d == 0:
            best = d
            break
    return unit * best


def _pad2(a, pad_rows: int, pad_cols: int):
    if pad_rows == 0 and pad_cols == 0:
        return a
    return jnp.pad(a, ((0, pad_rows), (0, pad_cols)))


def _vmem_limit_bytes() -> int:
    try:
        kind = jax.devices()[0].device_kind.lower()
    except Exception:
        kind = ""
    # v7x: 64 MiB physical VMEM per TensorCore -> stay well under it.
    if "7" in kind:
        return 48 * 1024 * 1024
    # v5e / v6e: 128 MiB physical.
    if "v5" in kind or "v6" in kind:
        return 96 * 1024 * 1024
    return 48 * 1024 * 1024


# --------------------------------------------------------------------------
# Kernels
# --------------------------------------------------------------------------
def _linear_single_block_kernel(x_ref, w_ref, b_ref, o_ref):
    # Whole problem in one VMEM block:  y = x . W^T + b
    acc = jax.lax.dot_general(
        x_ref[...],
        w_ref[...],
        dimension_numbers=(((1,), (1,)), ((), ())),
        preferred_element_type=jnp.float32,
    )
    o_ref[...] = (acc + b_ref[...]).astype(o_ref.dtype)


def _linear_grid_kernel_f32(x_ref, w_ref, b_ref, o_ref):
    # Accumulate directly into the resident f32 output block (no scratch).
    @pl.when(pl.program_id(2) == 0)
    def _():
        o_ref[...] = jnp.broadcast_to(b_ref[...], o_ref.shape)

    o_ref[...] += jax.lax.dot_general(
        x_ref[...],
        w_ref[...],
        dimension_numbers=(((1,), (1,)), ((), ())),
        preferred_element_type=jnp.float32,
    )


def _linear_grid_kernel_acc(x_ref, w_ref, b_ref, o_ref, acc_ref):
    # Lower-precision output: keep an f32 VMEM accumulator.
    k = pl.program_id(2)

    @pl.when(k == 0)
    def _():
        acc_ref[...] = jnp.broadcast_to(b_ref[...], acc_ref.shape).astype(jnp.float32)

    acc_ref[...] += jax.lax.dot_general(
        x_ref[...],
        w_ref[...],
        dimension_numbers=(((1,), (1,)), ((), ())),
        preferred_element_type=jnp.float32,
    )

    @pl.when(k == pl.num_programs(2) - 1)
    def _():
        o_ref[...] = acc_ref[...].astype(o_ref.dtype)


# --------------------------------------------------------------------------
# Wrapper
# --------------------------------------------------------------------------
_FAST_PATH_BYTES = 8 * 1024 * 1024  # everything fits easily in VMEM below this


@functools.partial(
    jax.jit, static_argnames=("tm_max", "tn_max", "tk_max", "cast_to_bf16")
)
def classifier_forward(x, weight, bias, *, tm_max=512, tn_max=1024, tk_max=1024,
                       cast_to_bf16=False):
    """y = x @ weight.T + bias  (nn.Linear forward), Pallas TPU kernel."""
    orig_shape = x.shape
    E = orig_shape[-1]
    x2 = x.reshape(-1, E)
    B = x2.shape[0]
    C, E2 = weight.shape
    assert E == E2, "embedding_dim mismatch"
    assert bias.shape == (C,)

    out_dtype = x.dtype
    if cast_to_bf16:
        x2 = x2.astype(jnp.bfloat16)
        weight = weight.astype(jnp.bfloat16)
    bias_f32 = bias.astype(jnp.float32)

    itemsize = jnp.dtype(x2.dtype).itemsize
    total_bytes = itemsize * (B * E + C * E) + 4 * (B * C + C)

    # ---------------- single-block fast path (no grid, no padding) --------
    if total_bytes <= _FAST_PATH_BYTES:
        y = pl.pallas_call(
            _linear_single_block_kernel,
            out_shape=jax.ShapeDtypeStruct((B, C), out_dtype),
        )(x2, weight, bias_f32.reshape(1, C))
        return y.reshape(orig_shape[:-1] + (C,))

    # ---------------- tiled 3-D grid path ---------------------------------
    sub = 16 if cast_to_bf16 else 8  # sublane alignment for the M dim

    # K (embedding) dim: at most pad to the next multiple of 128.
    Kp128 = _round_up(E, 128)
    if Kp128 <= tk_max:
        tk, Kp = E, E                     # single K block, zero padding
    else:
        tk = _largest_divisor_tile(Kp128, 128, tk_max)
        Kp = Kp128

    # N (classes) dim: keep W completely unpadded when one block covers it.
    Cp128 = _round_up(C, 128)
    if C <= tn_max:
        tn, Np = C, C
    else:
        tn = _largest_divisor_tile(Cp128, 128, tn_max)
        Np = Cp128

    # M (batch) dim: sublane alignment only.
    tm = min(tm_max, _round_up(B, sub))
    Mp = _round_up(B, tm)

    # Give v7x's two TensorCores at least 2 parallel blocks when the batch
    # axis collapses to a single block on a K-tiled problem.
    if Mp // tm == 1 and Np // tn == 1 and Kp // tk > 1 and tn % 256 == 0:
        tn //= 2

    x_p = _pad2(x2, Mp - B, Kp - E)
    w_p = _pad2(weight, Np - C, Kp - E)
    b_p = bias_f32 if Np == C else jnp.pad(bias_f32, (0, Np - C))
    b_p = b_p.reshape(1, Np)

    grid = (Mp // tm, Np // tn, Kp // tk)

    cost = pl.CostEstimate(
        flops=2 * Mp * Kp * Np,
        transcendentals=0,
        bytes_accessed=(itemsize * (grid[1] * Mp * Kp + grid[0] * Np * Kp)
                        + jnp.dtype(out_dtype).itemsize * Mp * Np),
    )

    in_specs = [
        pl.BlockSpec((tm, tk), lambda i, j, k: (i, k)),   # x
        pl.BlockSpec((tn, tk), lambda i, j, k: (j, k)),   # W in native (C, E)
        pl.BlockSpec((1, tn), lambda i, j, k: (0, j)),    # bias
    ]
    out_spec = pl.BlockSpec((tm, tn), lambda i, j, k: (i, j))

    if out_dtype == jnp.float32:
        kernel = _linear_grid_kernel_f32
        scratch_shapes = []
    else:
        kernel = _linear_grid_kernel_acc
        scratch_shapes = [pltpu.VMEM((tm, tn), jnp.float32)]

    y_p = pl.pallas_call(
        kernel,
        out_shape=jax.ShapeDtypeStruct((Mp, Np), out_dtype),
        grid_spec=pltpu.PrefetchScalarGridSpec(
            num_scalar_prefetch=0,
            grid=grid,
            in_specs=in_specs,
            out_specs=out_spec,
            scratch_shapes=scratch_shapes,
        ),
        compiler_params=pltpu.CompilerParams(
            dimension_semantics=("parallel", "parallel", "arbitrary"),
            vmem_limit_bytes=_vmem_limit_bytes(),
        ),
        cost_estimate=cost,
    )(x_p, w_p, b_p)

    y = y_p[:B, :C]
    return y.reshape(orig_shape[:-1] + (C,))


if __name__ == "__main__":
    key = jax.random.PRNGKey(0)

    # --- Small shapes consistent with the module (single-block fast path) --
    batch, embedding_dim, num_classes = 2, 32, 8
    kx, kw, kb = jax.random.split(key, 3)
    x = jax.random.normal(kx, (batch, embedding_dim), dtype=jnp.float32)
    weight = jax.random.normal(kw, (num_classes, embedding_dim),
                               dtype=jnp.float32) * 0.1
    bias = jax.random.normal(kb, (num_classes,), dtype=jnp.float32) * 0.1

    y = classifier_forward(x, weight, bias)
    jax.block_until_ready(y)
    y_ref = x @ weight.T + bias
    assert y.shape == (batch, num_classes)
    assert jnp.allclose(y, y_ref, atol=1e-5, rtol=1e-5)

    # --- Mid-size, non-aligned shapes (still fast path, zero padding) ------
    B2, E2, C2 = 64, 640, 200
    kx2, kw2, kb2 = jax.random.split(jax.random.PRNGKey(1), 3)
    x2 = jax.random.normal(kx2, (B2, E2), dtype=jnp.float32)
    w2 = jax.random.normal(kw2, (C2, E2), dtype=jnp.float32) * 0.05
    b2 = jax.random.normal(kb2, (C2,), dtype=jnp.float32) * 0.05

    y2 = classifier_forward(x2, w2, b2)
    jax.block_until_ready(y2)
    y2_ref = x2 @ w2.T + b2
    assert y2.shape == (B2, C2)
    assert jnp.allclose(y2, y2_ref, atol=1e-4, rtol=1e-4)

    # --- Larger, non-aligned shapes to exercise the tiled 3-D grid path ----
    B3, E3, C3 = 512, 1300, 1100
    kx3, kw3, kb3 = jax.random.split(jax.random.PRNGKey(2), 3)
    x3 = jax.random.normal(kx3, (B3, E3), dtype=jnp.float32)
    w3 = jax.random.normal(kw3, (C3, E3), dtype=jnp.float32) * 0.03
    b3 = jax.random.normal(kb3, (C3,), dtype=jnp.float32) * 0.03

    y3 = classifier_forward(x3, w3, b3)
    jax.block_until_ready(y3)
    y3_ref = x3 @ w3.T + b3
    assert y3.shape == (B3, C3)
    assert jnp.allclose(y3, y3_ref, atol=5e-3, rtol=5e-3)

    print("KERNEL_OK")
</pallas_src>

<mosaic_0001>
module attributes {stable_mosaic.version = 11 : i64} {
  func.func @_linear_single_block_kernel(%arg0: memref<2x32xf32, #tpu.memory_space<vmem>>, %arg1: memref<8x32xf32, #tpu.memory_space<vmem>>, %arg2: memref<1x8xf32, #tpu.memory_space<vmem>>, %arg3: memref<2x8xf32, #tpu.memory_space<vmem>>) attributes {dimension_semantics = [], scalar_prefetch = 0 : i64, scratch_operands = 0 : i64, tpu.core_type = #tpu.core_type<tc>} {
    %c0 = arith.constant 0 : index
    %c0_0 = arith.constant 0 : index
    %0 = vector.load %arg0[%c0, %c0_0] : memref<2x32xf32, #tpu.memory_space<vmem>>, vector<2x32xf32>
    %c0_1 = arith.constant 0 : index
    %c0_2 = arith.constant 0 : index
    %1 = vector.load %arg1[%c0_1, %c0_2] : memref<8x32xf32, #tpu.memory_space<vmem>>, vector<8x32xf32>
    %cst = arith.constant dense<0.000000e+00> : vector<2x8xf32>
    %2 = tpu.matmul %0, %1, %cst {dimension_numbers = #tpu.dot_dimension_numbers<[1], [1], [0], [0], [0, 0, 1, 0], [], []>} : vector<2x32xf32>, vector<8x32xf32>, vector<2x8xf32> -> vector<2x8xf32>
    %c0_3 = arith.constant 0 : index
    %c0_4 = arith.constant 0 : index
    %3 = vector.load %arg2[%c0_3, %c0_4] : memref<1x8xf32, #tpu.memory_space<vmem>>, vector<1x8xf32>
    %4 = vector.broadcast %3 : vector<1x8xf32> to vector<2x8xf32>
    %5 = arith.addf %2, %4 : vector<2x8xf32>
    %c0_5 = arith.constant 0 : index
    %c0_6 = arith.constant 0 : index
    %6 = vector.load %arg3[%c0_5, %c0_6] : memref<2x8xf32, #tpu.memory_space<vmem>>, vector<2x8xf32>
    tpu.vector_store %arg3[%c0_5, %c0_6], %5 {strides = array<i32>} : memref<2x8xf32, #tpu.memory_space<vmem>>, vector<2x8xf32>,
    return
  }
}

</mosaic_0001>

<llo_original>
// kernel: classifier_forward.1
$region0: #{classifier_forward.1}
  #allocation0 [shape = 'u32[]', space=smem, size = 0x4, offset = 0x4, fixed_abs, tag = 'smem constant byte address 0x4 - core index']
  #allocation1 [shape = 'u32[144,128]{1,0:T(1,128)}', space=vmem, size = 0x12000, scoped, tag = 'internal scratch']
  %s0 = inlined_call_operand.vmem [shape: f32[2,32], index: 0, kind: input, shape index: {}]
  %s1 = inlined_call_operand.hbm [shape: f32[8,32], index: 1, kind: input, shape index: {}]
  %s2 = inlined_call_operand.vmem [shape: f32[1,8], index: 2, kind: input, shape index: {}]
  %s3 = inlined_call_operand.hbm [shape: f32[2,8], index: 3, kind: output, shape index: {}]
  %s4 = sld [smem:[#allocation0]]
  $region26: #{classifier_forward.1} parent=0
    _
  %s6 = ssub.s32 1, %s4
  %s7 = scalar_select 0, %s6, %s4
  $region1: #{classifier_forward.1} parent=0
    #allocation2 [shape = 'u8[4096]{0}', space=vmem, size = 0x1000, scoped, tag = 'input window, operand 1, single buffered']
    #allocation3 [shape = 's32[1]{0}', space=sflag, size = 0x4, scoped, tag = 'scoped memory for classifier_forward.1']
    #allocation4 [shape = 's32[1]{0}', space=sflag, size = 0x4, scoped, tag = 'scoped memory for classifier_forward.1']
    #allocation5 [shape = 'u8[1024]{0}', space=vmem, size = 0x400, scoped, tag = 'output window, operand 0, single buffered']
    %8 = vsyncpa [#allocation3], 0
    %9 = vsyncpa [#allocation4], 0
    // Predicated region
    $region2: #{classifier_forward.1} parent=1 // pred_check
      _
    $region3: #{classifier_forward.1} parent=1 // pred_check_branch
      %11 = sbr.rel (0) target = $region5
    $region4: #{classifier_forward.1} parent=1 // pred_region
      _
    $region5: #{classifier_forward.1} parent=1 // pred_fallthru
      _
    // Predicated region
    $region6: #{classifier_forward.1} parent=1 // pred_check
      _
    $region7: #{classifier_forward.1} parent=1 // pred_check_branch
      %13 = sbr.rel (0) target = $region9
    $region8: #{classifier_forward.1} parent=1 // pred_region
      %s15 = ssub.s32 128, 128
      %16 = vsyncadd [#allocation3], %s15
      %s18 = sshll.u32 [#allocation2], 4
      %s19 = int_to_ptr.vmem [resolvable:$true] %s18
      %21 = dma.hbm_to_vmem [thread:$0]  %s1, 128, %s19, [#allocation3]
    $region9: #{classifier_forward.1} parent=1 // pred_fallthru
      _
    // Predicated region
    $region10: #{classifier_forward.1} parent=1 // pred_check
      _
    $region11: #{classifier_forward.1} parent=1 // pred_check_branch
      %23 = sbr.rel (0) target = $region13
    $region12: #{classifier_forward.1} parent=1 // pred_region
      _
    $region13: #{classifier_forward.1} parent=1 // pred_fallthru
      _
    // Predicated region
    $region14: #{classifier_forward.1} parent=1 // pred_check
      _
    $region15: #{classifier_forward.1} parent=1 // pred_check_branch
      %25 = sbr.rel (0) target = $region17
    $region16: #{classifier_forward.1} parent=1 // pred_region
      %26 = dma.done [#allocation3], 128
    $region17: #{classifier_forward.1} parent=1 // pred_fallthru
      _
    %v27 = vld [vmem:[%s0] sm:$0x3]
    %v28 = vld [vmem:[#allocation2] sm:$0xff]
    %v29 = vld [vmem:[%s2] sm:$0x1]
    %v31 = vlaneseq
    %v32 = vshrl.u32 %v31, 7
    %v33 = vsub.s32 0, %v32
    %v34 = vrot.slane %v29, %v33
    %vm36 = vcmask 261120
    %v38 = vsel %vm36, %v27, 0
    %v41 = vsel %vm36, %v28, 0
    %43 = vmatprep.subr.mxu0 0.0
    %44 = vmatpush1.xpose.msra.mxu0 %v41
    %45 = vmatprep.subr.mxu0 0.0
    %46 = vmatpush1.xpose.msra.mxu0 0.0
    %47 = vmatprep.subr.mxu0 0.0
    %48 = vmatpush1.xpose.msra.mxu0 0.0
    %49 = vmatprep.subr.mxu0 0.0
    %50 = vmatpush1.xpose.msra.mxu0 0.0
    %51 = vmatprep.subr.mxu0 0.0
    %52 = vmatpush1.xpose.msra.mxu0 0.0
    %53 = vmatprep.subr.mxu0 0.0
    %54 = vmatpush1.xpose.msra.mxu0 0.0
    %55 = vmatprep.subr.mxu0 0.0
    %56 = vmatpush1.xpose.msra.mxu0 0.0
    %57 = vmatprep.subr.mxu0 0.0
    %58 = vmatpush1.xpose.msra.mxu0 0.0
    %59 = vmatprep.subr.mxu0 0.0
    %60 = vmatpush1.xpose.msra.mxu0 0.0
    %61 = vmatprep.subr.mxu0 0.0
    %62 = vmatpush1.xpose.msra.mxu0 0.0
    %63 = vmatprep.subr.mxu0 0.0
    %64 = vmatpush1.xpose.msra.mxu0 0.0
    %65 = vmatprep.subr.mxu0 0.0
    %66 = vmatpush1.xpose.msra.mxu0 0.0
    %67 = vmatprep.subr.mxu0 0.0
    %68 = vmatpush1.xpose.msra.mxu0 0.0
    %69 = vmatprep.subr.mxu0 0.0
    %70 = vmatpush1.xpose.msra.mxu0 0.0
    %71 = vmatprep.subr.mxu0 0.0
    %72 = vmatpush1.xpose.msra.mxu0 0.0
    %73 = vmatprep.subr.mxu0 0.0
    %74 = vmatpush1.xpose.msra.mxu0 0.0
    %75 = vmatprep.subr.mxu0 0.0
    %76 = vmatpush1.xpose.msra.mxu0 0.0
    %77 = vmatprep.subr.mxu0 0.0
    %78 = vmatpush1.xpose.msra.mxu0 0.0
    %79 = vmatprep.subr.mxu0 0.0
    %80 = vmatpush1.xpose.msra.mxu0 0.0
    %81 = vmatprep.subr.mxu0 0.0
    %82 = vmatpush1.xpose.msra.mxu0 0.0
    %83 = vmatprep.subr.mxu0 0.0
    %84 = vmatpush1.xpose.msra.mxu0 0.0
    %85 = vmatprep.subr.mxu0 0.0
    %86 = vmatpush1.xpose.msra.mxu0 0.0
    %87 = vmatprep.subr.mxu0 0.0
    %88 = vmatpush1.xpose.msra.mxu0 0.0
    %89 = vmatprep.subr.mxu0 0.0
    %90 = vmatpush1.xpose.msra.mxu0 0.0
    %91 = vmatprep.subr.mxu0 0.0
    %92 = vmatpush1.xpose.msra.mxu0 0.0
    %93 = vmatprep.subr.mxu0 0.0
    %94 = vmatpush1.xpose.msra.mxu0 0.0
    %95 = vmatprep.subr.mxu0 0.0
    %96 = vmatpush1.xpose.msra.mxu0 0.0
    %97 = vmatprep.subr.mxu0 0.0
    %98 = vmatpush1.xpose.msra.mxu0 0.0
    %99 = vmatprep.subr.mxu0 0.0
    %100 = vmatpush1.xpose.msra.mxu0 0.0
    %101 = vmatprep.subr.mxu0 0.0
    %102 = vmatpush1.xpose.msra.mxu0 0.0
    %103 = vmatprep.subr.mxu0 0.0
    %104 = vmatpush1.xpose.msra.mxu0 0.0
    %105 = vmatprep.subr.mxu0 0.0
    %106 = vmatpush1.xpose.msra.mxu0 0.0
    %107 = vmatprep.mubr.f32.mxu0 0.0
    %108 = vmatmul.mubr.f32.gmra.mrb[0].mxu0 %v38
    %v109 = vpop.f32.mrb[0].mxu0
    %v110 = vadd.f32 %v34, %v109
    %v111 = vpop.f32.mrb[0].mxu0
    %112 = vdwg.mxu0
    %vm113 = vcmask 58368
    %114 = vst.msk [vmem:[#allocation5] sm:$0x3] %vm113, %v110
    // Predicated region
    $region18: #{classifier_forward.1} parent=1 // pred_check
      _
    $region19: #{classifier_forward.1} parent=1 // pred_check_branch
      %116 = sbr.rel (0) target = $region21
    $region20: #{classifier_forward.1} parent=1 // pred_region
      %s118 = ssub.s32 32, 32
      %119 = vsyncadd [#allocation4], %s118
      %s121 = sshll.u32 [#allocation5], 4
      %s122 = int_to_ptr.vmem [resolvable:$true] %s121
      %124 = dma.vmem_to_hbm [thread:$0]  %s122, 32, %s3, [#allocation4]
    $region21: #{classifier_forward.1} parent=1 // pred_fallthru
      _
    // Predicated region
    $region22: #{classifier_forward.1} parent=1 // pred_check
      _
    $region23: #{classifier_forward.1} parent=1 // pred_check_branch
      %126 = sbr.rel (0) target = $region25
    $region24: #{classifier_forward.1} parent=1 // pred_region
      %127 = dma.done [#allocation4], 32
    $region25: #{classifier_forward.1} parent=1 // pred_fallthru
      _
    %128 = vsyncpa [#allocation3], 1
    %129 = vsyncpa [#allocation4], 1

</llo_original>
